<compile_context>
chip_gen: v5e
topology: v5e:2x2
jax: 0.10.0
libtpu: 0.0.40
codegen_flags: <defaults>
</compile_context>

<pallas_src>
import functools

import jax
import jax.numpy as jnp
from jax import lax
from jax.experimental import pallas as pl
from jax.experimental.pallas import tpu as pltpu


def _focal_loss_kernel(x_ref, t_ref, o_ref, acc_ref, *, gamma: float, n_total: int):
    """x_ref: (TM, C) logits tile; t_ref: (TM, 1) int32 targets tile;
    o_ref: (1, 1) f32 SMEM output; acc_ref: (1, 1) f32 SMEM running sum."""
    step = pl.program_id(0)

    @pl.when(step == 0)
    def _init():
        acc_ref[0, 0] = jnp.float32(0.0)

    rows, c = x_ref.shape
    x = x_ref[...].astype(jnp.float32)          # cast per-tile, in-register
    t = t_ref[...]                              # (rows, 1) int32

    # Mask rows beyond N (partial last tile); zeroing also neutralizes any
    # padded/garbage data read for out-of-range rows.
    row_ids = step * rows + lax.broadcasted_iota(jnp.int32, (rows, 1), 0)
    valid = row_ids < n_total                   # (rows, 1) bool
    x = jnp.where(valid, x, 0.0)

    # Numerically stable log-softmax pieces.
    m = jnp.max(x, axis=-1, keepdims=True)                                    # (rows, 1)
    lse = m + jnp.log(jnp.sum(jnp.exp(x - m), axis=-1, keepdims=True))        # (rows, 1)

    # Gather logit at the target class via iota compare (no dynamic gather on TPU).
    class_ids = lax.broadcasted_iota(jnp.int32, (rows, c), 1)                 # (rows, C)
    x_at_t = jnp.sum(jnp.where(class_ids == t, x, 0.0), axis=-1, keepdims=True)

    nll = jnp.where(valid, lse - x_at_t, 0.0)                                 # (rows, 1)
    acc_ref[0, 0] += jnp.sum(nll)

    @pl.when(step == pl.num_programs(0) - 1)
    def _finalize():
        # Do the O(1) focal math once, on a (1,1) vector (robust lowering).
        ce = jnp.full((1, 1), acc_ref[0, 0], dtype=jnp.float32) * (1.0 / n_total)
        if gamma == 0.0:
            # PyTorch: (1 - p)**0 == 1  ->  loss == ce  (avoids pow(0, 0) NaN risk)
            loss = ce
        else:
            p = jnp.exp(-ce)
            loss = (1.0 - p) ** gamma * ce
        o_ref[0, 0] = jnp.sum(loss)


def _round_up(x: int, m: int) -> int:
    return ((x + m - 1) // m) * m


def _pick_tile_rows(n: int, c: int, itemsize: int) -> int:
    # Keep one logits tile <= 4 MiB so 2x pipeline buffers stay well inside the
    # scoped-VMEM default on every generation (v7x has only 64 MiB physical).
    budget = 4 * 1024 * 1024
    tm = max(8, min(1024, budget // max(1, c * itemsize)))
    tm = (tm // 8) * 8
    return min(tm, _round_up(n, 8))


def focal_loss(logits: jax.Array, target: jax.Array,
               gamma: float = 0.0, eps: float = 1e-07,
               tile_rows: int | None = None) -> jax.Array:
    """logits: (N, C) float; target: (N,) integer class ids. Returns scalar f32.

    `eps` is accepted for API parity but unused (same as the reference forward).
    """
    n, c = logits.shape
    t2d = target.astype(jnp.int32).reshape(n, 1)

    if tile_rows is None:
        tm = _pick_tile_rows(n, c, jnp.dtype(logits.dtype).itemsize)
    else:
        tm = min(max(8, (tile_rows // 8) * 8), _round_up(n, 8))
    num_tiles = pl.cdiv(n, tm)

    kernel = functools.partial(_focal_loss_kernel, gamma=float(gamma), n_total=n)

    out = pl.pallas_call(
        kernel,
        out_shape=jax.ShapeDtypeStruct((1, 1), jnp.float32),
        grid=(num_tiles,),
        in_specs=[
            pl.BlockSpec((tm, c), lambda i: (i, 0)),   # logits tile (native dtype)
            pl.BlockSpec((tm, 1), lambda i: (i, 0)),   # targets tile
        ],
        out_specs=pl.BlockSpec(memory_space=pltpu.MemorySpace.SMEM),
        scratch_shapes=[pltpu.SMEM((1, 1), jnp.float32)],
        compiler_params=pltpu.CompilerParams(
            dimension_semantics=("arbitrary",),        # reduction over row tiles
            vmem_limit_bytes=32 * 1024 * 1024,
        ),
    )(logits, t2d)
    return out[0, 0]


def _focal_loss_ref(logits, target, gamma=0.0):
    logp_rows = jax.nn.log_softmax(logits.astype(jnp.float32), axis=-1)
    nll = -jnp.take_along_axis(logp_rows, target[:, None], axis=-1)[:, 0]
    ce = jnp.mean(nll)
    if gamma == 0.0:
        return ce
    p = jnp.exp(-ce)
    return (1.0 - p) ** gamma * ce


if __name__ == "__main__":
    key = jax.random.PRNGKey(0)
    k1, k2, k3, k4 = jax.random.split(key, 4)

    # Case 1: multiple row tiles (exercises the grid accumulation), gamma > 0.
    N1, C1 = 16, 32
    logits1 = jax.random.normal(k1, (N1, C1), dtype=jnp.float32)
    target1 = jax.random.randint(k2, (N1,), 0, C1, dtype=jnp.int32)
    out1 = jax.block_until_ready(focal_loss(logits1, target1, gamma=2.0, tile_rows=8))
    ref1 = _focal_loss_ref(logits1, target1, gamma=2.0)
    assert jnp.allclose(out1, ref1, atol=1e-5, rtol=1e-5), (out1, ref1)

    # Case 2: N not a multiple of 8 (exercises row masking), default gamma=0.
    N2, C2 = 10, 32
    logits2 = jax.random.normal(k3, (N2, C2), dtype=jnp.float32)
    target2 = jax.random.randint(k4, (N2,), 0, C2, dtype=jnp.int32)
    out2 = jax.block_until_ready(focal_loss(logits2, target2))
    ref2 = _focal_loss_ref(logits2, target2, gamma=0.0)
    assert jnp.allclose(out2, ref2, atol=1e-5, rtol=1e-5), (out2, ref2)

    print("KERNEL_OK")
</pallas_src>

<mosaic_0001>
module attributes {stable_mosaic.version = 11 : i64} {
  func.func @_focal_loss_kernel(%arg0: i32, %arg1: memref<8x32xf32, #tpu.memory_space<vmem>>, %arg2: memref<8x1xi32, #tpu.memory_space<vmem>>, %arg3: memref<1x1xf32, #tpu.memory_space<smem>>, %arg4: memref<1x1xf32, #tpu.memory_space<smem>>) attributes {dimension_semantics = [#tpu.dimension_semantics<arbitrary>], iteration_bounds = array<i64: 2>, scalar_prefetch = 0 : i64, scratch_operands = 1 : i64, tpu.core_type = #tpu.core_type<tc>, window_params = [{transform_indices = @transform_0, window_bounds = array<i64: 8, 32>}, {transform_indices = @transform_1, window_bounds = array<i64: 8, 1>}, {transform_indices = @transform_2, window_bounds = array<i64: 1, 1>}]} {
    %c0_i32 = arith.constant 0 : i32
    %0 = arith.cmpi eq, %arg0, %c0_i32 : i32
    %1 = arith.extui %0 : i1 to i32
    %c0_i32_0 = arith.constant 0 : i32
    %2 = arith.cmpi ne, %1, %c0_i32_0 : i32
    scf.if %2 {
      %cst_15 = arith.constant 0.000000e+00 : f32
      %c0_16 = arith.constant 0 : index
      %c0_17 = arith.constant 0 : index
      %44 = memref.load %arg4[%c0_16, %c0_17] : memref<1x1xf32, #tpu.memory_space<smem>>
      memref.store %cst_15, %arg4[%c0_16, %c0_17] : memref<1x1xf32, #tpu.memory_space<smem>>
    } else {
    }
    %c0 = arith.constant 0 : index
    %c0_1 = arith.constant 0 : index
    %3 = vector.load %arg1[%c0, %c0_1] : memref<8x32xf32, #tpu.memory_space<vmem>>, vector<8x32xf32>
    %c0_2 = arith.constant 0 : index
    %c0_3 = arith.constant 0 : index
    %4 = vector.load %arg2[%c0_2, %c0_3] : memref<8x1xi32, #tpu.memory_space<vmem>>, vector<8x1xi32>
    %c8_i32 = arith.constant 8 : i32
    %5 = arith.muli %arg0, %c8_i32 : i32
    %6 = tpu.iota {dimensions = array<i32: 0>} : vector<8x1xi32>
    %7 = vector.broadcast %5 : i32 to vector<8x1xi32>
    %8 = arith.addi %7, %6 : vector<8x1xi32>
    %c16_i32 = arith.constant 16 : i32
    %9 = vector.broadcast %c16_i32 : i32 to vector<8x1xi32>
    %10 = arith.cmpi slt, %8, %9 : vector<8x1xi32>
    %cst = arith.constant 0.000000e+00 : f32
    %11 = vector.shape_cast %10 : vector<8x1xi1> to vector<8x1xi1>
    %12 = vector.broadcast %11 : vector<8x1xi1> to vector<8x32xi1>
    %13 = vector.broadcast %cst : f32 to vector<8x32xf32>
    %14 = arith.select %12, %3, %13 : vector<8x32xi1>, vector<8x32xf32>
    %cst_4 = arith.constant dense<0xFF800000> : vector<8xf32>
    %15 = vector.multi_reduction <maximumf>, %14, %cst_4 [1] : vector<8x32xf32> to vector<8xf32>
    %16 = vector.shape_cast %15 : vector<8xf32> to vector<8x1xf32>
    %17 = vector.broadcast %16 : vector<8x1xf32> to vector<8x32xf32>
    %18 = arith.subf %14, %17 : vector<8x32xf32>
    %19 = math.exp %18 : vector<8x32xf32>
    %cst_5 = arith.constant dense<0.000000e+00> : vector<8xf32>
    %20 = vector.multi_reduction <add>, %19, %cst_5 [1] : vector<8x32xf32> to vector<8xf32>
    %21 = vector.shape_cast %20 : vector<8xf32> to vector<8x1xf32>
    %22 = math.log %21 : vector<8x1xf32>
    %23 = arith.addf %16, %22 : vector<8x1xf32>
    %24 = tpu.iota {dimensions = array<i32: 1>} : vector<8x32xi32>
    %25 = vector.broadcast %4 : vector<8x1xi32> to vector<8x32xi32>
    %26 = arith.cmpi eq, %24, %25 : vector<8x32xi32>
    %cst_6 = arith.constant 0.000000e+00 : f32
    %27 = vector.broadcast %cst_6 : f32 to vector<8x32xf32>
    %28 = arith.select %26, %14, %27 : vector<8x32xi1>, vector<8x32xf32>
    %cst_7 = arith.constant dense<0.000000e+00> : vector<8xf32>
    %29 = vector.multi_reduction <add>, %28, %cst_7 [1] : vector<8x32xf32> to vector<8xf32>
    %30 = vector.shape_cast %29 : vector<8xf32> to vector<8x1xf32>
    %31 = arith.subf %23, %30 : vector<8x1xf32>
    %cst_8 = arith.constant 0.000000e+00 : f32
    %32 = vector.broadcast %cst_8 : f32 to vector<8x1xf32>
    %33 = arith.select %10, %31, %32 : vector<8x1xi1>, vector<8x1xf32>
    %c0_9 = arith.constant 0 : index
    %c0_10 = arith.constant 0 : index
    %34 = memref.load %arg4[%c0_9, %c0_10] : memref<1x1xf32, #tpu.memory_space<smem>>
    %35 = vector.shape_cast %33 : vector<8x1xf32> to vector<1x8x1xf32>
    %cst_11 = arith.constant dense<0.000000e+00> : vector<1xf32>
    %36 = vector.multi_reduction <add>, %35, %cst_11 [1, 2] : vector<1x8x1xf32> to vector<1xf32>
    %37 = vector.shape_cast %36 : vector<1xf32> to vector<1x1x1xf32>
    %38 = vector.extract %37[0, 0, 0] : f32 from vector<1x1x1xf32>
    %39 = arith.addf %34, %38 : f32
    %c0_12 = arith.constant 0 : index
    %c0_13 = arith.constant 0 : index
    %40 = memref.load %arg4[%c0_12, %c0_13] : memref<1x1xf32, #tpu.memory_space<smem>>
    memref.store %39, %arg4[%c0_12, %c0_13] : memref<1x1xf32, #tpu.memory_space<smem>>
    %c1_i32 = arith.constant 1 : i32
    %41 = arith.cmpi eq, %arg0, %c1_i32 : i32
    %42 = arith.extui %41 : i1 to i32
    %c0_i32_14 = arith.constant 0 : i32
    %43 = arith.cmpi ne, %42, %c0_i32_14 : i32
    scf.if %43 {
      %c0_15 = arith.constant 0 : index
      %c0_16 = arith.constant 0 : index
      %44 = memref.load %arg4[%c0_15, %c0_16] : memref<1x1xf32, #tpu.memory_space<smem>>
      %45 = vector.broadcast %44 : f32 to vector<1x1xf32>
      %cst_17 = arith.constant 6.250000e-02 : f32
      %46 = vector.broadcast %cst_17 : f32 to vector<1x1xf32>
      %47 = arith.mulf %45, %46 : vector<1x1xf32>
      %cst_18 = arith.constant 0.000000e+00 : f32
      %48 = vector.broadcast %cst_18 : f32 to vector<1x1xf32>
      %49 = arith.subf %48, %47 : vector<1x1xf32>
      %50 = math.exp %49 : vector<1x1xf32>
      %cst_19 = arith.constant 1.000000e+00 : f32
      %51 = vector.broadcast %cst_19 : f32 to vector<1x1xf32>
      %52 = arith.subf %51, %50 : vector<1x1xf32>
      %cst_20 = arith.constant 2.000000e+00 : f32
      %53 = vector.broadcast %cst_20 : f32 to vector<1x1xf32>
      %54 = math.powf %52, %53 : vector<1x1xf32>
      %55 = arith.mulf %54, %47 : vector<1x1xf32>
      %56 = vector.shape_cast %55 : vector<1x1xf32> to vector<1x1x1xf32>
      %cst_21 = arith.constant dense<0.000000e+00> : vector<1xf32>
      %57 = vector.multi_reduction <add>, %56, %cst_21 [1, 2] : vector<1x1x1xf32> to vector<1xf32>
      %58 = vector.shape_cast %57 : vector<1xf32> to vector<1x1x1xf32>
      %59 = vector.extract %58[0, 0, 0] : f32 from vector<1x1x1xf32>
      %c0_22 = arith.constant 0 : index
      %c0_23 = arith.constant 0 : index
      %60 = memref.load %arg3[%c0_22, %c0_23] : memref<1x1xf32, #tpu.memory_space<smem>>
      memref.store %59, %arg3[%c0_22, %c0_23] : memref<1x1xf32, #tpu.memory_space<smem>>
    } else {
    }
    return
  }
  func.func @transform_0(%arg0: i32) -> (i32, i32) {
    %c0_i32 = arith.constant 0 : i32
    %c0_i32_0 = arith.constant 0 : i32
    return %arg0, %c0_i32 : i32, i32
  }
  func.func @transform_1(%arg0: i32) -> (i32, i32) {
    %c0_i32 = arith.constant 0 : i32
    %c0_i32_0 = arith.constant 0 : i32
    return %arg0, %c0_i32 : i32, i32
  }
  func.func @transform_2(%arg0: i32) -> (i32, i32) {
    %c0_i32 = arith.constant 0 : i32
    %c0_i32_0 = arith.constant 0 : i32
    %c0_i32_1 = arith.constant 0 : i32
    return %c0_i32, %c0_i32_0 : i32, i32
  }
}

</mosaic_0001>

<llo_original>
// kernel: tpu_custom_call.1
$region0: #{tpu_custom_call.1}
  #allocation0 [shape = 'u32[]', space=smem, size = 0x4, offset = 0x4, fixed_abs, tag = 'smem constant byte address 0x4 - core index']
  #allocation1 [shape = 'u32[72,128]{1,0:T(1,128)}', space=vmem, size = 0x9000, scoped, tag = 'internal scratch']
  #allocation2 [shape = 'f32[1,1]{1,0:T(1,128)}', space=smem, size = 0x200, scoped, tag = 'scratch operand']
  %s0 = inlined_call_operand.vmem [shape: f32[16,32], index: 0, kind: input, shape index: {}]
  %s1 = inlined_call_operand.vmem [shape: s32[16,1], index: 1, kind: input, shape index: {}]
  %s2 = inlined_call_operand.hbm [shape: f32[1,1], index: 2, kind: output, shape index: {}]
  %s3 = sld [smem:[#allocation0]]
  $region49: #{tpu_custom_call.1} parent=0
    _
  %s5 = ssub.s32 1, %s3
  %s6 = scalar_select 0, %s5, %s3
  $region1: #{tpu_custom_call.1} parent=0
    #allocation3 [shape = 'u8[512]{0}', space=smem, size = 0x200, scoped, tag = 'output window, operand 0, single buffered']
    #allocation4 [shape = 's32[2]{0}', space=sflag, size = 0x8, scoped, tag = 'scoped memory for tpu_custom_call.1']
    %7 = vsyncpa [#allocation4], 0
    loop: start=0, step=1, limit=4
    $region2: #{tpu_custom_call.1} parent=1 // loop_pre_header
      _
    $region3: #{tpu_custom_call.1} parent=1 // loop_header
      %s9 = sphi 0, %s13
      %p10 = scmp.ge.s32.totalorder %s9, 4
      %s19 = sphi 0, %s21
      %s22 = sphi 0, %s19
      %s23 = sphi 0, %s22
      %s39 = sphi 0, %s23
      %s45 = sphi 0, %s47
      %s48 = sphi 0, %s45
      %s49 = sphi 0, %s48
      %s65 = sphi 0, %s49
      %s69 = sphi 0, %s69
      %s71 = sphi 0, %s69
      %s72 = sphi 0, %s71
      %s86 = sphi 0, %s72
    $region4: #{tpu_custom_call.1} parent=1 // loop_header_branch
      %12 = sbr.rel (%p10) target = $region8
    $region5: #{tpu_custom_call.1} parent=1 // loop_body
      %s14 = ssub.s32 %s9, 1
      %s15 = ssub.s32 %s9, 2
      %s16 = sadd.s32 %s9, 1
      %s17 = ssub.s32 %s9, %s16
      %p18 = scmp.eq.s32.totalorder %s17, 0
      %s20 = sadd.s32 %s19, 1
      %s21 = scalar_select %p18, %s19, %s20
      %p24 = pneg %p18
      %p25 = scmp.eq.s32.totalorder %s9, 1
      %p26 = por %p24, %p25
      %p27 = scmp.ne.s32.totalorder %s19, %s22
      %p28 = scmp.eq.s32.totalorder %s9, 0
      %p29 = por %p27, %p28
      %p30 = scmp.ne.s32.totalorder %s19, %s22
      %p31 = scmp.eq.s32.totalorder %s14, 1
      %p32 = por %p30, %p31
      %p33 = scmp.ne.s32.totalorder %s22, %s23
      %p34 = scmp.eq.s32.totalorder %s14, 0
      %p35 = por %p33, %p34
      %p36 = scmp.ne.s32.totalorder %s22, %s23
      %p37 = scmp.eq.s32.totalorder %s15, 1
      %p38 = por %p36, %p37
      %p40 = scmp.ne.s32.totalorder %s23, %s39
      %p41 = scmp.eq.s32.totalorder %s15, 0
      %p42 = por %p40, %p41
      %s43 = ssub.s32 %s9, %s16
      %p44 = scmp.eq.s32.totalorder %s43, 0
      %s46 = sadd.s32 %s45, 1
      %s47 = scalar_select %p44, %s45, %s46
      %p50 = pneg %p44
      %p51 = scmp.eq.s32.totalorder %s9, 1
      %p52 = por %p50, %p51
      %p53 = scmp.ne.s32.totalorder %s45, %s48
      %p54 = scmp.eq.s32.totalorder %s9, 0
      %p55 = por %p53, %p54
      %p56 = scmp.ne.s32.totalorder %s45, %s48
      %p57 = scmp.eq.s32.totalorder %s14, 1
      %p58 = por %p56, %p57
      %p59 = scmp.ne.s32.totalorder %s48, %s49
      %p60 = scmp.eq.s32.totalorder %s14, 0
      %p61 = por %p59, %p60
      %p62 = scmp.ne.s32.totalorder %s48, %s49
      %p63 = scmp.eq.s32.totalorder %s15, 1
      %p64 = por %p62, %p63
      %p66 = scmp.ne.s32.totalorder %s49, %s65
      %p67 = scmp.eq.s32.totalorder %s15, 0
      %p68 = por %p66, %p67
      %s70 = sadd.s32 %s69, 1
      %p73 = scmp.eq.s32.totalorder %s9, 1
      %p74 = scmp.ne.s32.totalorder %s69, %s71
      %p75 = scmp.eq.s32.totalorder %s9, 0
      %p76 = por %p74, %p75
      %p77 = scmp.ne.s32.totalorder %s69, %s71
      %p78 = scmp.eq.s32.totalorder %s14, 1
      %p79 = por %p77, %p78
      %p80 = scmp.ne.s32.totalorder %s71, %s72
      %p81 = scmp.eq.s32.totalorder %s14, 0
      %p82 = por %p80, %p81
      %p83 = scmp.ne.s32.totalorder %s71, %s72
      %p84 = scmp.eq.s32.totalorder %s15, 1
      %p85 = por %p83, %p84
      %p87 = scmp.ne.s32.totalorder %s72, %s86
      %p88 = scmp.eq.s32.totalorder %s15, 0
      %p89 = por %p87, %p88
      %p90 = scmp.le.s32.totalorder 1, %s9
      %p91 = scmp.lt.s32.totalorder %s9, 3
      %p92 = pnand %p90, %p91
      %p93 = pneg %p92
      // Predicated region
      $region9: #{tpu_custom_call.1} parent=5 // pred_check
        _
      $region10: #{tpu_custom_call.1} parent=5 // pred_check_branch
        %95 = sbr.rel (%p92) target = $region12
      $region11: #{tpu_custom_call.1} parent=5 // pred_region
        %s96 = ssub.s32 %s9, 1
      $region12: #{tpu_custom_call.1} parent=5 // pred_fallthru
        _
      %p97 = scmp.lt.s32.totalorder %s9, 2
      // Predicated region
      $region13: #{tpu_custom_call.1} parent=5 // pred_check
        %p98 = pneg %p97
      $region14: #{tpu_custom_call.1} parent=5 // pred_check_branch
        %100 = sbr.rel (%p98) target = $region16
      $region15: #{tpu_custom_call.1} parent=5 // pred_region
        // Predicated region
        $region17: #{tpu_custom_call.1} parent=15 // pred_check
          %p101 = pneg %p29
        $region18: #{tpu_custom_call.1} parent=15 // pred_check_branch
          %103 = sbr.rel (%p101) target = $region20
        $region19: #{tpu_custom_call.1} parent=15 // pred_region
          %p104 = scmp.lt.s32.totalorder %s9, 1
          %s105 = scalar_select %p104, %s9, 1
          %s106 = smul.addr %s105, 8
          %s107 = scalar_lea.vmem %s0, %s106
        $region20: #{tpu_custom_call.1} parent=15 // pred_fallthru
          _
        // Predicated region
        $region21: #{tpu_custom_call.1} parent=15 // pred_check
          %p108 = pneg %p55
        $region22: #{tpu_custom_call.1} parent=15 // pred_check_branch
          %110 = sbr.rel (%p108) target = $region24
        $region23: #{tpu_custom_call.1} parent=15 // pred_region
          %p111 = scmp.lt.s32.totalorder %s9, 1
          %s112 = scalar_select %p111, %s9, 1
          %s113 = smul.addr %s112, 8
          %s114 = scalar_lea.vmem %s1, %s113
        $region24: #{tpu_custom_call.1} parent=15 // pred_fallthru
          _
      $region16: #{tpu_custom_call.1} parent=5 // pred_fallthru
        _
      %p115 = scmp.le.s32.totalorder 1, %s9
      %p116 = scmp.lt.s32.totalorder %s9, 3
      %p117 = pnand %p115, %p116
      %p118 = pneg %p117
      // Predicated region
      $region25: #{tpu_custom_call.1} parent=5 // pred_check
        _
      $region26: #{tpu_custom_call.1} parent=5 // pred_check_branch
        %120 = sbr.rel (%p117) target = $region28
      $region27: #{tpu_custom_call.1} parent=5 // pred_region
        %s121 = ssub.s32 %s9, 1
        %p122 = scmp.lt.s32.totalorder %s14, 1
        %s123 = scalar_select %p122, %s14, 1
        %s124 = smul.addr %s123, 8
        %s125 = scalar_lea.vmem %s0, %s124
        %p126 = pneg %p35
        %p127 = pneg %p32
        %p128 = scmp.lt.s32.totalorder %s14, 1
        %s129 = scalar_select %p128, %s14, 1
        %s130 = smul.addr %s129, 8
        %s131 = scalar_lea.vmem %s1, %s130
        %p132 = pneg %p61
        %p133 = pneg %p58
        %p134 = pneg %p82
        %p135 = pneg %p79
        %p136 = scmp.lt.s32.totalorder %s14, 1
        %s137 = scalar_select %p136, %s14, 1
        %s138 = smul.addr %s137, 8
        %s139 = scalar_lea.vmem %s0, %s138
        %p140 = scmp.lt.s32.totalorder %s14, 1
        %s141 = scalar_select %p140, %s14, 1
        %s142 = smul.addr %s141, 8
        %s143 = scalar_lea.vmem %s1, %s142
        %p144 = scmp.eq.s32.totalorder %s14, 0
        // Predicated region
        $region29: #{tpu_custom_call.1} parent=27 // pred_check
          %p145 = pneg %p144
        $region30: #{tpu_custom_call.1} parent=27 // pred_check_branch
          %147 = sbr.rel (%p145) target = $region32
        $region31: #{tpu_custom_call.1} parent=27 // pred_region
          %s148 = scalar_lea.smem [#allocation2], 0
          %149 = sst [smem:[%s148]] 0.0
        $region32: #{tpu_custom_call.1} parent=27 // pred_fallthru
          _
        %v150 = vld [vmem:[%s139] sm:$0xff]
        %v151 = vld [vmem:[%s143] sm:$0xff]
        %s152 = smul.u32 %s14, 8
        %v153 = vlaneseq
        %v154 = vshrl.u32 %v153, 7
        %v155 = vstv %s152
        %v156 = vadd.s32 %v155, %v154
        %vm157 = vcmp.lt.s32.totalorder %v156, 16
        %v158 = vsel %vm157, 1, 0
        %vm159 = vcmp.eq.s32.totalorder %v158, 1
        %v160 = vsel %vm159, %v150, 0.0
        %vm161 = vcmask 261120
        %v162 = vsel %vm161, %v160, -inf
        %163 = vmax.xlane.f32.xlu0 %v162
        %v164 = vpop.xlane.xlu0 %163
        %v165 = vsub.f32 %v160, %v164
        %v166 = vmul.f32 %v165, 1.442695
        %v167 = vpow.pop %v166
        %v168 = vsel %vm161, %v167, 0.0
        %169 = vadd.xlane.f32.xlu0 %v168
        %v170 = vpop.xlane.xlu0 %169
        %v171 = vlog2.pop %v170
        %v172 = vmul.f32 %v171, 0.6931472
        %v173 = vadd.f32 %v164, %v172
        %v174 = vlaneseq
        %v175 = vand.u32 %v174, 127
        %176 = vset.pattern.permute.xlu0 0
        %177 = vperm.xlu0 %176, %v151
        %v178 = vpop.permute.xlu0 %177
        %vm179 = vcmp.eq.s32.totalorder %v175, %v178
        %v180 = vsel %vm179, %v160, 0.0
        %v181 = vsel %vm161, %v180, 0.0
        %182 = vadd.xlane.f32.xlu0 %v181
        %v183 = vpop.xlane.xlu0 %182
        %v184 = vsub.f32 %v173, %v183
        %v185 = vsel %vm157, %v184, 0.0
        %s186 = sld [smem:[#allocation2]]
        %vm187 = vcmask 7168
        %v188 = vsel %vm187, %v185, 0.0
        %189 = vadd.xlane.f32.xlu0 %v188
        %v190 = vpop.xlane.xlu0 %189
        %v191 = vrot.slane %v190, 4
        %v192 = vadd.f32 %v190, %v191
        %v193 = vrot.slane %v192, 2
        %v194 = vadd.f32 %v192, %v193
        %v195 = vrot.slane %v194, 1
        %v196 = vadd.f32 %v194, %v195
        %s197 = vtos %v196
        %s198 = sadd.f32 %s186, %s197
        %s199 = scalar_lea.smem [#allocation2], 0
        %200 = sst [smem:[%s199]] %s198
        %p201 = scmp.eq.s32.totalorder %s14, 1
        // Predicated region
        $region33: #{tpu_custom_call.1} parent=27 // pred_check
          %p202 = pneg %p201
        $region34: #{tpu_custom_call.1} parent=27 // pred_check_branch
          %204 = sbr.rel (%p202) target = $region36
        $region35: #{tpu_custom_call.1} parent=27 // pred_region
          %s205 = sld [smem:[#allocation2]]
          %v206 = vstv %s205
          %v207 = vmul.f32 %v206, 0.0625
          %v208 = vsub.f32 0.0, %v207
          %v209 = vmul.f32 %v208, 1.442695
          %v210 = vpow.pop %v209
          %v211 = vsub.f32 1.0, %v210
          %v212 = vpow.f32 %v211, 2.0
          %v213 = vmul.f32 %v212, %v207
          %v214 = vadd.f32 %v213, 0.0
          %s215 = vtos %v214
          %s216 = scalar_lea.smem [#allocation3], 0
          %217 = sst [smem:[%s216]] %s215
        $region36: #{tpu_custom_call.1} parent=27 // pred_fallthru
          _
        // Predicated region
        $region37: #{tpu_custom_call.1} parent=27 // pred_check
          %p218 = pneg %p79
        $region38: #{tpu_custom_call.1} parent=27 // pred_check_branch
          %220 = sbr.rel (%p218) target = $region40
        $region39: #{tpu_custom_call.1} parent=27 // pred_region
          %222 = vsyncadd [#allocation4], 0
          %s224 = sshll.u32 %s2, 4
          %s225 = int_to_ptr.hbm [resolvable:$true] %s224
          %227 = dma.smem_to_hbm [#allocation3], 16, %s225, [#allocation4]
        $region40: #{tpu_custom_call.1} parent=27 // pred_fallthru
          _
        // Predicated region
        $region41: #{tpu_custom_call.1} parent=27 // pred_check
          %p228 = pneg %p79
        $region42: #{tpu_custom_call.1} parent=27 // pred_check_branch
          %230 = sbr.rel (%p228) target = $region44
        $region43: #{tpu_custom_call.1} parent=27 // pred_region
          %232 = dma.done [#allocation4], 16
        $region44: #{tpu_custom_call.1} parent=27 // pred_fallthru
          _
        %233 = sfence
      $region28: #{tpu_custom_call.1} parent=5 // pred_fallthru
        _
      %p234 = scmp.le.s32.totalorder 2, %s9
      // Predicated region
      $region45: #{tpu_custom_call.1} parent=5 // pred_check
        %p235 = pneg %p234
      $region46: #{tpu_custom_call.1} parent=5 // pred_check_branch
        %237 = sbr.rel (%p235) target = $region48
      $region47: #{tpu_custom_call.1} parent=5 // pred_region
        %s238 = ssub.s32 %s9, 2
      $region48: #{tpu_custom_call.1} parent=5 // pred_fallthru
        _
    $region6: #{tpu_custom_call.1} parent=1 // loop_footer
      %s13 = sadd.s32 1, %s9
    $region7: #{tpu_custom_call.1} parent=1 // loop_footer_branch
      %8 = sbr.rel target = $region3
    $region8: #{tpu_custom_call.1} parent=1 // loop_exit
      _
    %239 = vsyncpa [#allocation4], 1
    %s240 = scalar_lea.sflag [#allocation4], 1
    %241 = vsyncpa %s240, 1

</llo_original>
